<compile_context>
chip_gen: v7x
topology: tpu7x:2x2x1
jax: 0.10.0
libtpu: 0.0.40
codegen_flags: <defaults>
</compile_context>

<pallas_src>
import functools

import numpy as np

import jax
import jax.numpy as jnp
from jax.experimental import pallas as pl
from jax.experimental.pallas import tpu as pltpu


LANE = 128     # lane width (last dim)
SUBLANE = 8    # sublane width (second-to-last dim)
N_BIAS_ROWS = 16


def _round_up(n, m):
    return ((n + m - 1) // m) * m


def _act_dtype():
    """bf16 activations on chips with a bf16 VPU (v6e/v7x), else f32."""
    try:
        kind = jax.devices()[0].device_kind.lower()
    except Exception:  # pragma: no cover
        return jnp.bfloat16
    if any(tag in kind for tag in ("v2", "v3", "v4", "v5")):
        return jnp.float32
    return jnp.bfloat16


def _w_offsets(DINp, Hp, Kp, Pp):
    """Row offsets of each Linear weight inside the packed weight slab."""
    offs = {}
    r = 0
    for name, rows in (("we1", DINp), ("we2", Hp), ("we3", Hp),
                       ("wr1", Pp), ("wr2", Hp), ("wr3", Hp),
                       ("wd1", Kp), ("wd2", Hp), ("wd3", Hp)):
        offs[name] = r
        r += rows
    return offs, r


# --------------------------------------------------------------------------- #
# Fused Pallas kernel (built per padded-dim configuration)
# --------------------------------------------------------------------------- #
def _make_kernel(DINp, Hp, Kp, Pp, act_dtype):
    offs, _ = _w_offsets(DINp, Hp, Kp, Pp)
    K2 = 2 * Kp

    def kernel(in_ref, w_ref, b_ref, xout_ref, lat_ref):
        def lin(h, name, rows, cols, b_row, relu, out_dtype):
            # Static (128-aligned) slices into the packed slabs: zero runtime
            # cost.  bf16 MXU operands, f32 accumulation, f32 bias add.
            w = w_ref[offs[name]:offs[name] + rows, 0:cols]
            b = b_ref[b_row:b_row + 1, 0:cols]
            y = jnp.dot(h.astype(jnp.bfloat16), w,
                        preferred_element_type=jnp.float32) + b
            if relu:
                y = jnp.maximum(y, 0.0)
            return y.astype(out_dtype)

        # ---- unpack the single input slab: [x | params | eps] --------------
        x = in_ref[:, 0:DINp]
        p = in_ref[:, DINp:DINp + Pp]
        eps = in_ref[:, DINp + Pp:DINp + Pp + Kp]

        # ---- normalization statistics (f32 rows of the bias slab) ----------
        ts_mean = b_ref[9:10, 0:DINp]
        ts_istd = b_ref[10:11, 0:DINp]
        ts_std = b_ref[11:12, 0:DINp]
        p_mean = b_ref[12:13, 0:Pp]
        p_istd = b_ref[13:14, 0:Pp]

        # ---- timeseries normalization (multiply by precomputed 1/std) ------
        x_norm = (x - ts_mean) * ts_istd
        xout_ref[:, 0:DINp] = x_norm

        # ---- Encoder: Linear-ReLU-Linear-ReLU-Linear (merged mu|logvar) ----
        h = lin(x_norm, "we1", DINp, Hp, 0, True, act_dtype)
        h = lin(h, "we2", Hp, Hp, 1, True, act_dtype)
        lat_e = lin(h, "we3", Hp, K2, 2, False, jnp.float32)   # (Bp, 2*Kp)
        lat_ref[:, 0:K2] = lat_e
        mu_e = lat_e[:, 0:Kp]
        logvar_e = lat_e[:, Kp:K2]

        # ---- Regressor (NormalizationLayer1D done inline in f32) -----------
        p_norm = (p - p_mean) * p_istd
        hr = lin(p_norm, "wr1", Pp, Hp, 3, True, act_dtype)
        hr = lin(hr, "wr2", Hp, Hp, 4, True, act_dtype)
        lat_ref[:, K2:2 * K2] = lin(hr, "wr3", Hp, K2, 5, False, jnp.float32)

        # ---- reparametrize with the encoder latent (train=True, 1 pass) ----
        z = eps * jnp.exp(0.5 * logvar_e) + mu_e

        # ---- Decoder + timeseries denormalization --------------------------
        hd = lin(z, "wd1", Kp, Hp, 6, True, act_dtype)
        hd = lin(hd, "wd2", Hp, Hp, 7, True, act_dtype)
        x_hat_norm = lin(hd, "wd3", Hp, DINp, 8, False, jnp.float32)
        xout_ref[:, DINp:2 * DINp] = x_hat_norm
        xout_ref[:, 2 * DINp:3 * DINp] = x_hat_norm * ts_std + ts_mean

    return kernel


# --------------------------------------------------------------------------- #
# Raw (PyTorch-equivalent) parameter construction
# --------------------------------------------------------------------------- #
def _linear_params(key, d_in, d_out):
    kw, kb = jax.random.split(key)
    w = jax.random.normal(kw, (d_in, d_out), jnp.float32) * 0.1
    b = jax.random.normal(kb, (1, d_out), jnp.float32) * 0.1
    return w, b


def _mlp3_params(key, d_in, d_hidden, d_out):
    k1, k2, k3 = jax.random.split(key, 3)
    w1, b1 = _linear_params(k1, d_in, d_hidden)
    w2, b2 = _linear_params(k2, d_hidden, d_hidden)
    w3, b3 = _linear_params(k3, d_hidden, d_out)
    return (w1, b1, w2, b2, w3, b3)


def init_vae_params(key, n_states, n_outputs, seq_len, parameter_dim,
                    hidden_dim, bottleneck_dim):
    n_channels = n_states + n_outputs
    k_enc, k_reg, k_dec, k_tsm, k_pm = jax.random.split(key, 5)
    return {
        # NormalizationLayerTimeSeries buffers (per-channel mean / std)
        "ts_mean": jax.random.normal(k_tsm, (n_channels, 1), jnp.float32) * 0.5,
        "ts_std": 1.0 + 0.1 * jnp.arange(n_channels, dtype=jnp.float32).reshape(n_channels, 1),
        # NormalizationLayer1D buffers (per-feature mean / std of params)
        "p_mean": jax.random.normal(k_pm, (1, parameter_dim), jnp.float32) * 0.5,
        "p_std": 1.0 + 0.1 * jnp.arange(parameter_dim, dtype=jnp.float32).reshape(1, parameter_dim),
        # Encoder: (C*L) -> H -> H -> 2*K
        "encoder": _mlp3_params(k_enc, n_channels * seq_len, hidden_dim, 2 * bottleneck_dim),
        # Regressor: P -> H -> H -> 2*K
        "regressor": _mlp3_params(k_reg, parameter_dim, hidden_dim, 2 * bottleneck_dim),
        # Decoder (params_to_decoder=False): K -> H -> H -> C*L
        "decoder": _mlp3_params(k_dec, bottleneck_dim, hidden_dim, n_channels * seq_len),
    }


# --------------------------------------------------------------------------- #
# One-time parameter prep: pack everything into two lane-dense slabs
# --------------------------------------------------------------------------- #
def prepare_vae_params(raw, *, n_states, n_outputs, seq_len, parameter_dim,
                       hidden_dim, bottleneck_dim):
    C, L = n_states + n_outputs, seq_len
    DIN, H, K, P = C * L, hidden_dim, bottleneck_dim, parameter_dim
    DINp, Hp, Kp, Pp = (_round_up(d, LANE) for d in (DIN, H, K, P))
    Wmax = max(Hp, 2 * Kp, DINp)
    offs, total_rows = _w_offsets(DINp, Hp, Kp, Pp)

    we1, be1, we2, be2, we3, be3 = raw["encoder"]
    wr1, br1, wr2, br2, wr3, br3 = raw["regressor"]
    wd1, bd1, wd2, bd2, wd3, bd3 = raw["decoder"]

    # ---- weight slab (bf16): all 9 Linear weights stacked along sublanes ----
    w_slab = jnp.zeros((total_rows, Wmax), jnp.float32)

    def put(slab, name, w):
        r = offs[name]
        return slab.at[r:r + w.shape[0], 0:w.shape[1]].set(w)

    def put_head(slab, name, w):
        # merged mu/logvar head: mu -> lanes [0:K), logvar -> lanes [Kp:Kp+K)
        r = offs[name]
        slab = slab.at[r:r + w.shape[0], 0:K].set(w[:, :K])
        slab = slab.at[r:r + w.shape[0], Kp:Kp + K].set(w[:, K:])
        return slab

    w_slab = put(w_slab, "we1", we1)
    w_slab = put(w_slab, "we2", we2)
    w_slab = put_head(w_slab, "we3", we3)
    w_slab = put(w_slab, "wr1", wr1)
    w_slab = put(w_slab, "wr2", wr2)
    w_slab = put_head(w_slab, "wr3", wr3)
    w_slab = put(w_slab, "wd1", wd1)
    w_slab = put(w_slab, "wd2", wd2)
    w_slab = put(w_slab, "wd3", wd3)
    # Fold is done in f32; only the final packed slab is cast to bf16.
    w_slab = w_slab.astype(jnp.bfloat16)

    # ---- bias + normalization-stat slab (f32): one row per vector -----------
    b_slab = jnp.zeros((N_BIAS_ROWS, Wmax), jnp.float32)

    def put_b(slab, row, v):
        v = jnp.asarray(v).reshape(-1)
        return slab.at[row, 0:v.shape[0]].set(v)

    def put_b_head(slab, row, v):
        v = jnp.asarray(v).reshape(-1)
        slab = slab.at[row, 0:K].set(v[:K])
        slab = slab.at[row, Kp:Kp + K].set(v[K:])
        return slab

    b_slab = put_b(b_slab, 0, be1)
    b_slab = put_b(b_slab, 1, be2)
    b_slab = put_b_head(b_slab, 2, be3)
    b_slab = put_b(b_slab, 3, br1)
    b_slab = put_b(b_slab, 4, br2)
    b_slab = put_b_head(b_slab, 5, br3)
    b_slab = put_b(b_slab, 6, bd1)
    b_slab = put_b(b_slab, 7, bd2)
    b_slab = put_b(b_slab, 8, bd3)

    ts_mean_flat = jnp.broadcast_to(raw["ts_mean"], (C, L)).reshape(-1)
    ts_std_flat = jnp.broadcast_to(raw["ts_std"], (C, L)).reshape(-1)
    b_slab = put_b(b_slab, 9, ts_mean_flat)
    b_slab = put_b(b_slab, 10, 1.0 / ts_std_flat)
    b_slab = put_b(b_slab, 11, ts_std_flat)
    b_slab = put_b(b_slab, 12, raw["p_mean"])
    b_slab = put_b(b_slab, 13, 1.0 / raw["p_std"])

    return (w_slab, b_slab)


# --------------------------------------------------------------------------- #
# VAE forward (train=True, predict=False, n_passes=1, params_to_decoder=False,
#              feed_forward_nn=False)
# --------------------------------------------------------------------------- #
@functools.partial(jax.jit, static_argnames=("n_states", "n_outputs", "seq_len",
                                             "parameter_dim", "hidden_dim",
                                             "bottleneck_dim"))
def vae_forward(prepared, states, outputs, param_vec, eps, *,
                n_states, n_outputs, seq_len, parameter_dim, hidden_dim,
                bottleneck_dim):
    w_slab, b_slab = prepared
    C, L = n_states + n_outputs, seq_len
    DIN, H, K, P = C * L, hidden_dim, bottleneck_dim, parameter_dim
    DINp, Hp, Kp, Pp = (_round_up(d, LANE) for d in (DIN, H, K, P))
    B = states.shape[0]
    Bp = _round_up(B, SUBLANE)

    act_dtype = _act_dtype()

    # ---- glue: one lane-dense input slab [x | params | eps] -----------------
    x3 = jnp.concatenate([states, outputs], axis=1)               # (B, C, L)
    in_w = DINp + Pp + Kp
    in_slab = jnp.zeros((Bp, in_w), jnp.float32)
    in_slab = in_slab.at[:B, 0:DIN].set(x3.reshape(B, DIN))
    in_slab = in_slab.at[:B, DINp:DINp + P].set(param_vec)
    in_slab = in_slab.at[:B, DINp + Pp:DINp + Pp + K].set(eps)

    kernel = _make_kernel(DINp, Hp, Kp, Pp, act_dtype)
    vspec = pl.BlockSpec(memory_space=pltpu.MemorySpace.VMEM)

    xout_slab, lat_slab = pl.pallas_call(
        kernel,
        out_shape=(
            jax.ShapeDtypeStruct((Bp, 3 * DINp), jnp.float32),   # x_norm|x_hat_norm|x_hat
            jax.ShapeDtypeStruct((Bp, 4 * Kp), jnp.float32),     # mu_e|lv_e|mu_r|lv_r
        ),
        in_specs=[vspec, vspec, vspec],
        out_specs=(vspec, vspec),
    )(in_slab, w_slab, b_slab)

    # ---- slice the two output slabs apart ------------------------------------
    x_norm = xout_slab[:B, 0:DIN].reshape(B, C, L)
    x_hat_norm = xout_slab[:B, DINp:DINp + DIN].reshape(B, C, L)
    x_hat = xout_slab[:B, 2 * DINp:2 * DINp + DIN].reshape(B, C, L)
    mu_encoder = lat_slab[:B, 0:K]
    logvar_encoder = lat_slab[:B, Kp:Kp + K]
    mu_regressor = lat_slab[:B, 2 * Kp:2 * Kp + K]
    logvar_regressor = lat_slab[:B, 3 * Kp:3 * Kp + K]

    states_norm, outputs_norm = x_norm[:, :n_states], x_norm[:, n_states:]
    states_hat, outputs_hat = x_hat[:, :n_states], x_hat[:, n_states:]
    states_hat_norm, outputs_hat_norm = x_hat_norm[:, :n_states], x_hat_norm[:, n_states:]

    retvals_norm = {
        "x": x_norm, "x_hat": x_hat_norm,
        "states": states_norm, "outputs": outputs_norm,
        "states_hat": states_hat_norm, "outputs_hat": outputs_hat_norm,
    }
    return (x3, x_hat, states_hat, outputs_hat,
            mu_encoder, logvar_encoder, mu_regressor, logvar_regressor,
            retvals_norm)


# --------------------------------------------------------------------------- #
# Pure-JAX f32 reference (direct translation of the PyTorch forward)
# --------------------------------------------------------------------------- #
def vae_forward_reference(raw, states, outputs, param_vec, eps,
                          *, n_states, n_outputs, seq_len, bottleneck_dim):
    C, L, K = n_states + n_outputs, seq_len, bottleneck_dim
    B = states.shape[0]

    def mlp3(h, p):
        w1, b1, w2, b2, w3, b3 = p
        h = jnp.maximum(h @ w1 + b1, 0.0)
        h = jnp.maximum(h @ w2 + b2, 0.0)
        return h @ w3 + b3

    x = jnp.concatenate([states, outputs], axis=1)
    x_norm = (x - raw["ts_mean"][None]) / raw["ts_std"][None]
    enc = mlp3(x_norm.reshape(B, -1), raw["encoder"])
    mu_e, lv_e = enc[:, :K], enc[:, K:]
    p_norm = (param_vec - raw["p_mean"]) / raw["p_std"]
    reg = mlp3(p_norm, raw["regressor"])
    mu_r, lv_r = reg[:, :K], reg[:, K:]
    z = eps * jnp.exp(0.5 * lv_e) + mu_e
    x_hat_norm = mlp3(z, raw["decoder"]).reshape(B, C, L)
    x_hat = x_hat_norm * raw["ts_std"][None] + raw["ts_mean"][None]
    return x, x_norm, x_hat_norm, x_hat, mu_e, lv_e, mu_r, lv_r


# --------------------------------------------------------------------------- #
# Main
# --------------------------------------------------------------------------- #
if __name__ == "__main__":
    B = 2
    n_states, n_outputs = 2, 2          # n_channels = 4
    seq_len = 8
    parameter_dim = 3
    hidden_dim = 32
    bottleneck_dim = 4

    key = jax.random.PRNGKey(0)
    k_par, k_s, k_o, k_p, k_eps = jax.random.split(key, 5)

    raw_params = init_vae_params(k_par, n_states, n_outputs, seq_len,
                                 parameter_dim, hidden_dim, bottleneck_dim)
    prepared = prepare_vae_params(raw_params, n_states=n_states, n_outputs=n_outputs,
                                  seq_len=seq_len, parameter_dim=parameter_dim,
                                  hidden_dim=hidden_dim, bottleneck_dim=bottleneck_dim)

    states = jax.random.normal(k_s, (B, n_states, seq_len), jnp.float32)
    outputs = jax.random.normal(k_o, (B, n_outputs, seq_len), jnp.float32)
    param_vec = jax.random.normal(k_p, (B, parameter_dim), jnp.float32)
    eps = jax.random.normal(k_eps, (B, bottleneck_dim), jnp.float32)

    out = vae_forward(prepared, states, outputs, param_vec, eps,
                      n_states=n_states, n_outputs=n_outputs, seq_len=seq_len,
                      parameter_dim=parameter_dim, hidden_dim=hidden_dim,
                      bottleneck_dim=bottleneck_dim)
    jax.block_until_ready(out)

    (x, x_hat, states_hat, outputs_hat,
     mu_e, logvar_e, mu_r, logvar_r, retvals_norm) = out

    # Shape checks (match the PyTorch module's return structure).
    C = n_states + n_outputs
    assert x.shape == (B, C, seq_len)
    assert x_hat.shape == (B, C, seq_len)
    assert states_hat.shape == (B, n_states, seq_len)
    assert outputs_hat.shape == (B, n_outputs, seq_len)
    assert mu_e.shape == (B, bottleneck_dim) and logvar_e.shape == (B, bottleneck_dim)
    assert mu_r.shape == (B, bottleneck_dim) and logvar_r.shape == (B, bottleneck_dim)
    assert retvals_norm["x_hat"].shape == (B, C, seq_len)

    # Numerical check vs the pure-JAX f32 reference.  The kernel intentionally
    # uses bf16 MXU operands (and bf16 activations on v6e/v7x), so agreement is
    # at the ~1e-2 level by design.
    rx, rxn, rxhn, rxh, rmu_e, rlv_e, rmu_r, rlv_r = vae_forward_reference(
        raw_params, states, outputs, param_vec, eps,
        n_states=n_states, n_outputs=n_outputs, seq_len=seq_len,
        bottleneck_dim=bottleneck_dim)

    tol = dict(rtol=5e-2, atol=5e-2)
    np.testing.assert_allclose(np.asarray(x), np.asarray(rx), **tol)
    np.testing.assert_allclose(np.asarray(retvals_norm["x"]), np.asarray(rxn), **tol)
    np.testing.assert_allclose(np.asarray(mu_e), np.asarray(rmu_e), **tol)
    np.testing.assert_allclose(np.asarray(logvar_e), np.asarray(rlv_e), **tol)
    np.testing.assert_allclose(np.asarray(mu_r), np.asarray(rmu_r), **tol)
    np.testing.assert_allclose(np.asarray(logvar_r), np.asarray(rlv_r), **tol)
    np.testing.assert_allclose(np.asarray(retvals_norm["x_hat"]), np.asarray(rxhn), **tol)
    np.testing.assert_allclose(np.asarray(x_hat), np.asarray(rxh), **tol)

    print("KERNEL_OK")
</pallas_src>

<mosaic_0001>
module attributes {stable_mosaic.version = 11 : i64} {
  func.func @kernel(%arg0: memref<8x384xf32, #tpu.memory_space<vmem>>, %arg1: memref<1152x256xbf16, #tpu.memory_space<vmem>>, %arg2: memref<16x256xf32, #tpu.memory_space<vmem>>, %arg3: memref<8x384xf32, #tpu.memory_space<vmem>>, %arg4: memref<8x512xf32, #tpu.memory_space<vmem>>) attributes {dimension_semantics = [], scalar_prefetch = 0 : i64, scratch_operands = 0 : i64, tpu.core_type = #tpu.core_type<tc>} {
    %c0 = arith.constant 0 : index
    %c0_0 = arith.constant 0 : index
    %0 = vector.load %arg0[%c0, %c0_0] : memref<8x384xf32, #tpu.memory_space<vmem>>, vector<8x128xf32>
    %c0_1 = arith.constant 0 : index
    %c128 = arith.constant 128 : index
    %1 = vector.load %arg0[%c0_1, %c128] : memref<8x384xf32, #tpu.memory_space<vmem>>, vector<8x128xf32>
    %c0_2 = arith.constant 0 : index
    %c256 = arith.constant 256 : index
    %2 = vector.load %arg0[%c0_2, %c256] : memref<8x384xf32, #tpu.memory_space<vmem>>, vector<8x128xf32>
    %c9 = arith.constant 9 : index
    %c0_3 = arith.constant 0 : index
    %3 = vector.load %arg2[%c9, %c0_3] : memref<16x256xf32, #tpu.memory_space<vmem>>, vector<1x128xf32>
    %c10 = arith.constant 10 : index
    %c0_4 = arith.constant 0 : index
    %4 = vector.load %arg2[%c10, %c0_4] : memref<16x256xf32, #tpu.memory_space<vmem>>, vector<1x128xf32>
    %c11 = arith.constant 11 : index
    %c0_5 = arith.constant 0 : index
    %5 = vector.load %arg2[%c11, %c0_5] : memref<16x256xf32, #tpu.memory_space<vmem>>, vector<1x128xf32>
    %c12 = arith.constant 12 : index
    %c0_6 = arith.constant 0 : index
    %6 = vector.load %arg2[%c12, %c0_6] : memref<16x256xf32, #tpu.memory_space<vmem>>, vector<1x128xf32>
    %c13 = arith.constant 13 : index
    %c0_7 = arith.constant 0 : index
    %7 = vector.load %arg2[%c13, %c0_7] : memref<16x256xf32, #tpu.memory_space<vmem>>, vector<1x128xf32>
    %8 = vector.broadcast %3 : vector<1x128xf32> to vector<8x128xf32>
    %9 = arith.subf %0, %8 : vector<8x128xf32>
    %10 = vector.broadcast %4 : vector<1x128xf32> to vector<8x128xf32>
    %11 = arith.mulf %9, %10 : vector<8x128xf32>
    %c0_8 = arith.constant 0 : index
    %c0_9 = arith.constant 0 : index
    %12 = vector.load %arg3[%c0_8, %c0_9] : memref<8x384xf32, #tpu.memory_space<vmem>>, vector<8x128xf32>
    tpu.vector_store %arg3[%c0_8, %c0_9], %11 {strides = array<i32>} : memref<8x384xf32, #tpu.memory_space<vmem>>, vector<8x128xf32>,
    %c0_10 = arith.constant 0 : index
    %c0_11 = arith.constant 0 : index
    %13 = vector.load %arg1[%c0_10, %c0_11] : memref<1152x256xbf16, #tpu.memory_space<vmem>>, vector<128x128xbf16>
    %c0_12 = arith.constant 0 : index
    %c0_13 = arith.constant 0 : index
    %14 = vector.load %arg2[%c0_12, %c0_13] : memref<16x256xf32, #tpu.memory_space<vmem>>, vector<1x128xf32>
    %15 = arith.truncf %11 : vector<8x128xf32> to vector<8x128xbf16>
    %cst = arith.constant dense<0.000000e+00> : vector<8x128xf32>
    %16 = tpu.matmul %15, %13, %cst {dimension_numbers = #tpu.dot_dimension_numbers<[1], [0], [0], [1], [0, 0, 1, 1], [], []>} : vector<8x128xbf16>, vector<128x128xbf16>, vector<8x128xf32> -> vector<8x128xf32>
    %17 = vector.broadcast %14 : vector<1x128xf32> to vector<8x128xf32>
    %18 = arith.addf %16, %17 : vector<8x128xf32>
    %cst_14 = arith.constant 0.000000e+00 : f32
    %19 = vector.broadcast %cst_14 : f32 to vector<8x128xf32>
    %20 = arith.maximumf %18, %19 : vector<8x128xf32>
    %21 = arith.truncf %20 : vector<8x128xf32> to vector<8x128xbf16>
    %c128_15 = arith.constant 128 : index
    %c0_16 = arith.constant 0 : index
    %22 = vector.load %arg1[%c128_15, %c0_16] : memref<1152x256xbf16, #tpu.memory_space<vmem>>, vector<128x128xbf16>
    %c1 = arith.constant 1 : index
    %c0_17 = arith.constant 0 : index
    %23 = vector.load %arg2[%c1, %c0_17] : memref<16x256xf32, #tpu.memory_space<vmem>>, vector<1x128xf32>
    %cst_18 = arith.constant dense<0.000000e+00> : vector<8x128xf32>
    %24 = tpu.matmul %21, %22, %cst_18 {dimension_numbers = #tpu.dot_dimension_numbers<[1], [0], [0], [1], [0, 0, 1, 1], [], []>} : vector<8x128xbf16>, vector<128x128xbf16>, vector<8x128xf32> -> vector<8x128xf32>
    %25 = vector.broadcast %23 : vector<1x128xf32> to vector<8x128xf32>
    %26 = arith.addf %24, %25 : vector<8x128xf32>
    %cst_19 = arith.constant 0.000000e+00 : f32
    %27 = vector.broadcast %cst_19 : f32 to vector<8x128xf32>
    %28 = arith.maximumf %26, %27 : vector<8x128xf32>
    %29 = arith.truncf %28 : vector<8x128xf32> to vector<8x128xbf16>
    %c256_20 = arith.constant 256 : index
    %c0_21 = arith.constant 0 : index
    %30 = vector.load %arg1[%c256_20, %c0_21] : memref<1152x256xbf16, #tpu.memory_space<vmem>>, vector<128x256xbf16>
    %c2 = arith.constant 2 : index
    %c0_22 = arith.constant 0 : index
    %31 = vector.load %arg2[%c2, %c0_22] : memref<16x256xf32, #tpu.memory_space<vmem>>, vector<1x256xf32>
    %cst_23 = arith.constant dense<0.000000e+00> : vector<8x256xf32>
    %32 = tpu.matmul %29, %30, %cst_23 {dimension_numbers = #tpu.dot_dimension_numbers<[1], [0], [0], [1], [0, 0, 1, 1], [], []>} : vector<8x128xbf16>, vector<128x256xbf16>, vector<8x256xf32> -> vector<8x256xf32>
    %33 = vector.broadcast %31 : vector<1x256xf32> to vector<8x256xf32>
    %34 = arith.addf %32, %33 : vector<8x256xf32>
    %c0_24 = arith.constant 0 : index
    %c0_25 = arith.constant 0 : index
    %35 = vector.load %arg4[%c0_24, %c0_25] : memref<8x512xf32, #tpu.memory_space<vmem>>, vector<8x256xf32>
    tpu.vector_store %arg4[%c0_24, %c0_25], %34 {strides = array<i32>} : memref<8x512xf32, #tpu.memory_space<vmem>>, vector<8x256xf32>,
    %36 = vector.extract_strided_slice %34 {offsets = [0, 0], sizes = [8, 128], strides = [1, 1]} : vector<8x256xf32> to vector<8x128xf32>
    %37 = vector.extract_strided_slice %34 {offsets = [0, 128], sizes = [8, 128], strides = [1, 1]} : vector<8x256xf32> to vector<8x128xf32>
    %38 = vector.broadcast %6 : vector<1x128xf32> to vector<8x128xf32>
    %39 = arith.subf %1, %38 : vector<8x128xf32>
    %40 = vector.broadcast %7 : vector<1x128xf32> to vector<8x128xf32>
    %41 = arith.mulf %39, %40 : vector<8x128xf32>
    %c384 = arith.constant 384 : index
    %c0_26 = arith.constant 0 : index
    %42 = vector.load %arg1[%c384, %c0_26] : memref<1152x256xbf16, #tpu.memory_space<vmem>>, vector<128x128xbf16>
    %c3 = arith.constant 3 : index
    %c0_27 = arith.constant 0 : index
    %43 = vector.load %arg2[%c3, %c0_27] : memref<16x256xf32, #tpu.memory_space<vmem>>, vector<1x128xf32>
    %44 = arith.truncf %41 : vector<8x128xf32> to vector<8x128xbf16>
    %cst_28 = arith.constant dense<0.000000e+00> : vector<8x128xf32>
    %45 = tpu.matmul %44, %42, %cst_28 {dimension_numbers = #tpu.dot_dimension_numbers<[1], [0], [0], [1], [0, 0, 1, 1], [], []>} : vector<8x128xbf16>, vector<128x128xbf16>, vector<8x128xf32> -> vector<8x128xf32>
    %46 = vector.broadcast %43 : vector<1x128xf32> to vector<8x128xf32>
    %47 = arith.addf %45, %46 : vector<8x128xf32>
    %cst_29 = arith.constant 0.000000e+00 : f32
    %48 = vector.broadcast %cst_29 : f32 to vector<8x128xf32>
    %49 = arith.maximumf %47, %48 : vector<8x128xf32>
    %50 = arith.truncf %49 : vector<8x128xf32> to vector<8x128xbf16>
    %c512 = arith.constant 512 : index
    %c0_30 = arith.constant 0 : index
    %51 = vector.load %arg1[%c512, %c0_30] : memref<1152x256xbf16, #tpu.memory_space<vmem>>, vector<128x128xbf16>
    %c4 = arith.constant 4 : index
    %c0_31 = arith.constant 0 : index
    %52 = vector.load %arg2[%c4, %c0_31] : memref<16x256xf32, #tpu.memory_space<vmem>>, vector<1x128xf32>
    %cst_32 = arith.constant dense<0.000000e+00> : vector<8x128xf32>
    %53 = tpu.matmul %50, %51, %cst_32 {dimension_numbers = #tpu.dot_dimension_numbers<[1], [0], [0], [1], [0, 0, 1, 1], [], []>} : vector<8x128xbf16>, vector<128x128xbf16>, vector<8x128xf32> -> vector<8x128xf32>
    %54 = vector.broadcast %52 : vector<1x128xf32> to vector<8x128xf32>
    %55 = arith.addf %53, %54 : vector<8x128xf32>
    %cst_33 = arith.constant 0.000000e+00 : f32
    %56 = vector.broadcast %cst_33 : f32 to vector<8x128xf32>
    %57 = arith.maximumf %55, %56 : vector<8x128xf32>
    %58 = arith.truncf %57 : vector<8x128xf32> to vector<8x128xbf16>
    %c640 = arith.constant 640 : index
    %c0_34 = arith.constant 0 : index
    %59 = vector.load %arg1[%c640, %c0_34] : memref<1152x256xbf16, #tpu.memory_space<vmem>>, vector<128x256xbf16>
    %c5 = arith.constant 5 : index
    %c0_35 = arith.constant 0 : index
    %60 = vector.load %arg2[%c5, %c0_35] : memref<16x256xf32, #tpu.memory_space<vmem>>, vector<1x256xf32>
    %cst_36 = arith.constant dense<0.000000e+00> : vector<8x256xf32>
    %61 = tpu.matmul %58, %59, %cst_36 {dimension_numbers = #tpu.dot_dimension_numbers<[1], [0], [0], [1], [0, 0, 1, 1], [], []>} : vector<8x128xbf16>, vector<128x256xbf16>, vector<8x256xf32> -> vector<8x256xf32>
    %62 = vector.broadcast %60 : vector<1x256xf32> to vector<8x256xf32>
    %63 = arith.addf %61, %62 : vector<8x256xf32>
    %c0_37 = arith.constant 0 : index
    %c256_38 = arith.constant 256 : index
    %64 = vector.load %arg4[%c0_37, %c256_38] : memref<8x512xf32, #tpu.memory_space<vmem>>, vector<8x256xf32>
    tpu.vector_store %arg4[%c0_37, %c256_38], %63 {strides = array<i32>} : memref<8x512xf32, #tpu.memory_space<vmem>>, vector<8x256xf32>,
    %cst_39 = arith.constant 5.000000e-01 : f32
    %65 = vector.broadcast %cst_39 : f32 to vector<8x128xf32>
    %66 = arith.mulf %65, %37 : vector<8x128xf32>
    %67 = math.exp %66 : vector<8x128xf32>
    %68 = arith.mulf %2, %67 : vector<8x128xf32>
    %69 = arith.addf %68, %36 : vector<8x128xf32>
    %c768 = arith.constant 768 : index
    %c0_40 = arith.constant 0 : index
    %70 = vector.load %arg1[%c768, %c0_40] : memref<1152x256xbf16, #tpu.memory_space<vmem>>, vector<128x128xbf16>
    %c6 = arith.constant 6 : index
    %c0_41 = arith.constant 0 : index
    %71 = vector.load %arg2[%c6, %c0_41] : memref<16x256xf32, #tpu.memory_space<vmem>>, vector<1x128xf32>
    %72 = arith.truncf %69 : vector<8x128xf32> to vector<8x128xbf16>
    %cst_42 = arith.constant dense<0.000000e+00> : vector<8x128xf32>
    %73 = tpu.matmul %72, %70, %cst_42 {dimension_numbers = #tpu.dot_dimension_numbers<[1], [0], [0], [1], [0, 0, 1, 1], [], []>} : vector<8x128xbf16>, vector<128x128xbf16>, vector<8x128xf32> -> vector<8x128xf32>
    %74 = vector.broadcast %71 : vector<1x128xf32> to vector<8x128xf32>
    %75 = arith.addf %73, %74 : vector<8x128xf32>
    %cst_43 = arith.constant 0.000000e+00 : f32
    %76 = vector.broadcast %cst_43 : f32 to vector<8x128xf32>
    %77 = arith.maximumf %75, %76 : vector<8x128xf32>
    %78 = arith.truncf %77 : vector<8x128xf32> to vector<8x128xbf16>
    %c896 = arith.constant 896 : index
    %c0_44 = arith.constant 0 : index
    %79 = vector.load %arg1[%c896, %c0_44] : memref<1152x256xbf16, #tpu.memory_space<vmem>>, vector<128x128xbf16>
    %c7 = arith.constant 7 : index
    %c0_45 = arith.constant 0 : index
    %80 = vector.load %arg2[%c7, %c0_45] : memref<16x256xf32, #tpu.memory_space<vmem>>, vector<1x128xf32>
    %cst_46 = arith.constant dense<0.000000e+00> : vector<8x128xf32>
    %81 = tpu.matmul %78, %79, %cst_46 {dimension_numbers = #tpu.dot_dimension_numbers<[1], [0], [0], [1], [0, 0, 1, 1], [], []>} : vector<8x128xbf16>, vector<128x128xbf16>, vector<8x128xf32> -> vector<8x128xf32>
    %82 = vector.broadcast %80 : vector<1x128xf32> to vector<8x128xf32>
    %83 = arith.addf %81, %82 : vector<8x128xf32>
    %cst_47 = arith.constant 0.000000e+00 : f32
    %84 = vector.broadcast %cst_47 : f32 to vector<8x128xf32>
    %85 = arith.maximumf %83, %84 : vector<8x128xf32>
    %86 = arith.truncf %85 : vector<8x128xf32> to vector<8x128xbf16>
    %c1024 = arith.constant 1024 : index
    %c0_48 = arith.constant 0 : index
    %87 = vector.load %arg1[%c1024, %c0_48] : memref<1152x256xbf16, #tpu.memory_space<vmem>>, vector<128x128xbf16>
    %c8 = arith.constant 8 : index
    %c0_49 = arith.constant 0 : index
    %88 = vector.load %arg2[%c8, %c0_49] : memref<16x256xf32, #tpu.memory_space<vmem>>, vector<1x128xf32>
    %cst_50 = arith.constant dense<0.000000e+00> : vector<8x128xf32>
    %89 = tpu.matmul %86, %87, %cst_50 {dimension_numbers = #tpu.dot_dimension_numbers<[1], [0], [0], [1], [0, 0, 1, 1], [], []>} : vector<8x128xbf16>, vector<128x128xbf16>, vector<8x128xf32> -> vector<8x128xf32>
    %90 = vector.broadcast %88 : vector<1x128xf32> to vector<8x128xf32>
    %91 = arith.addf %89, %90 : vector<8x128xf32>
    %c0_51 = arith.constant 0 : index
    %c128_52 = arith.constant 128 : index
    %92 = vector.load %arg3[%c0_51, %c128_52] : memref<8x384xf32, #tpu.memory_space<vmem>>, vector<8x128xf32>
    tpu.vector_store %arg3[%c0_51, %c128_52], %91 {strides = array<i32>} : memref<8x384xf32, #tpu.memory_space<vmem>>, vector<8x128xf32>,
    %93 = vector.broadcast %5 : vector<1x128xf32> to vector<8x128xf32>
    %94 = arith.mulf %91, %93 : vector<8x128xf32>
    %95 = vector.broadcast %3 : vector<1x128xf32> to vector<8x128xf32>
    %96 = arith.addf %94, %95 : vector<8x128xf32>
    %c0_53 = arith.constant 0 : index
    %c256_54 = arith.constant 256 : index
    %97 = vector.load %arg3[%c0_53, %c256_54] : memref<8x384xf32, #tpu.memory_space<vmem>>, vector<8x128xf32>
    tpu.vector_store %arg3[%c0_53, %c256_54], %96 {strides = array<i32>} : memref<8x384xf32, #tpu.memory_space<vmem>>, vector<8x128xf32>,
    return
  }
}

</mosaic_0001>

<llo_original>
// kernel: vae_forward.1
$region0: #{vae_forward.1}
  #allocation0 [shape = 'u32[]', space=smem, size = 0x4, offset = 0x4, fixed_abs, tag = 'smem constant byte address 0x4 - core index']
  #allocation1 [shape = 'u32[144,128]{1,0:T(1,128)}', space=vmem, size = 0x12000, scoped, tag = 'internal scratch']
  %s0 = inlined_call_operand.vmem [shape: f32[8,384], index: 0, kind: input, shape index: {}]
  %s1 = inlined_call_operand.hbm [shape: bf16[1152,256], index: 1, kind: input, shape index: {}]
  %s2 = inlined_call_operand.vmem [shape: f32[16,256], index: 2, kind: input, shape index: {}]
  %s3 = inlined_call_operand.vmem [shape: f32[8,384], index: 3, kind: output, shape index: {0}]
  %s4 = inlined_call_operand.vmem [shape: f32[8,512], index: 4, kind: output, shape index: {1}]
  %5 = xla_tuple %s3, %s4
  %s6 = sld [smem:[#allocation0]]
  $region34: #{vae_forward.1} parent=0
    _
  %s8 = ssub.s32 1, %s6
  %s9 = scalar_select 0, %s8, %s6
  $region1: #{vae_forward.1} parent=0
    #allocation2 [shape = 'u8[589824]{0}', space=vmem, size = 0x90000, scoped, tag = 'input window, operand 1, single buffered']
    #allocation3 [shape = 's32[1]{0}', space=sflag, size = 0x4, scoped, tag = 'scoped memory for vae_forward.1']
    %10 = vsyncpa [#allocation3], 0
    // Predicated region
    $region2: #{vae_forward.1} parent=1 // pred_check
      _
    $region3: #{vae_forward.1} parent=1 // pred_check_branch
      %12 = sbr.rel (0) target = $region5
    $region4: #{vae_forward.1} parent=1 // pred_region
      _
    $region5: #{vae_forward.1} parent=1 // pred_fallthru
      _
    // Predicated region
    $region6: #{vae_forward.1} parent=1 // pred_check
      _
    $region7: #{vae_forward.1} parent=1 // pred_check_branch
      %14 = sbr.rel (0) target = $region9
    $region8: #{vae_forward.1} parent=1 // pred_region
      %s16 = ssub.s32 18432, 18432
      %17 = vsyncadd [#allocation3], %s16
      %s18 = sshll.u32 [#allocation2], 4
      %s19 = int_to_ptr.vmem [resolvable:$true] %s18
      %24 = dma.hbm_to_vmem [thread:$0]  %s1, 18432, %s19, [#allocation3], 128, 128, 8
    $region9: #{vae_forward.1} parent=1 // pred_fallthru
      _
    // Predicated region
    $region10: #{vae_forward.1} parent=1 // pred_check
      _
    $region11: #{vae_forward.1} parent=1 // pred_check_branch
      %26 = sbr.rel (0) target = $region13
    $region12: #{vae_forward.1} parent=1 // pred_region
      _
    $region13: #{vae_forward.1} parent=1 // pred_fallthru
      _
    // Predicated region
    $region14: #{vae_forward.1} parent=1 // pred_check
      _
    $region15: #{vae_forward.1} parent=1 // pred_check_branch
      %28 = sbr.rel (0) target = $region17
    $region16: #{vae_forward.1} parent=1 // pred_region
      %29 = dma.done [#allocation3], 18432
    $region17: #{vae_forward.1} parent=1 // pred_fallthru
      _
    %v31 = vld [vmem:[%s0] sm:$0xff]
    %v32 = vld [vmem:[%s0 + $0x8] sm:$0xff]
    %v33 = vld [vmem:[%s0 + $0x10] sm:$0xff]
    %v34 = vld [vmem:[%s2 + $0x11] ss:$0 sm:$0xff]
    %v35 = vld [vmem:[%s2 + $0x12] ss:$0 sm:$0xff]
    %v36 = vld [vmem:[%s2 + $0x13] ss:$0 sm:$0xff]
    %v37 = vld [vmem:[%s2 + $0x14] ss:$0 sm:$0xff]
    %v38 = vld [vmem:[%s2 + $0x15] ss:$0 sm:$0xff]
    %v39 = vsub.f32 %v31, %v34
    %v40 = vmul.f32 %v39, %v35
    %41 = vst [vmem:[%s3] sm:$0xff] %v40
    %v42 = vld [vmem:[#allocation2] sm:$0xf]
    %v43 = vld [vmem:[#allocation2 + $0x8] sm:$0xf]
    %v44 = vld [vmem:[#allocation2 + $0x10] sm:$0xf]
    %v45 = vld [vmem:[#allocation2 + $0x18] sm:$0xf]
    %v46 = vld [vmem:[#allocation2 + $0x20] sm:$0xf]
    %v47 = vld [vmem:[#allocation2 + $0x28] sm:$0xf]
    %v48 = vld [vmem:[#allocation2 + $0x30] sm:$0xf]
    %v49 = vld [vmem:[#allocation2 + $0x38] sm:$0xf]
    %v50 = vld [vmem:[#allocation2 + $0x40] sm:$0xf]
    %v51 = vld [vmem:[#allocation2 + $0x48] sm:$0xf]
    %v52 = vld [vmem:[#allocation2 + $0x50] sm:$0xf]
    %v53 = vld [vmem:[#allocation2 + $0x58] sm:$0xf]
    %v54 = vld [vmem:[#allocation2 + $0x60] sm:$0xf]
    %v55 = vld [vmem:[#allocation2 + $0x68] sm:$0xf]
    %v56 = vld [vmem:[#allocation2 + $0x70] sm:$0xf]
    %v57 = vld [vmem:[#allocation2 + $0x78] sm:$0xf]
    %v58 = vld [vmem:[%s2] ss:$0 sm:$0xff]
    %v59 = vpack.c.bf16 %v40, %v40
    %v76 = vunpack.c.l.b16 %v42
    %v77 = vunpack.c.l.b16 %v43
    %v78 = vunpack.c.l.b16 %v44
    %v79 = vunpack.c.l.b16 %v45
    %v80 = vunpack.c.l.b16 %v46
    %v81 = vunpack.c.l.b16 %v47
    %v82 = vunpack.c.l.b16 %v48
    %v83 = vunpack.c.l.b16 %v49
    %v84 = vunpack.c.l.b16 %v50
    %v85 = vunpack.c.l.b16 %v51
    %v86 = vunpack.c.l.b16 %v52
    %v87 = vunpack.c.l.b16 %v53
    %v88 = vunpack.c.l.b16 %v54
    %v89 = vunpack.c.l.b16 %v55
    %v90 = vunpack.c.l.b16 %v56
    %v91 = vunpack.c.l.b16 %v57
    %v92 = vpack.c.b16 %v77, %v76
    %v93 = vpack.c.b16 %v79, %v78
    %v94 = vpack.c.b16 %v81, %v80
    %v95 = vpack.c.b16 %v83, %v82
    %v96 = vpack.c.b16 %v85, %v84
    %v97 = vpack.c.b16 %v87, %v86
    %v98 = vpack.c.b16 %v89, %v88
    %v99 = vpack.c.b16 %v91, %v90
    %108 = vmatprep.subr.bf16.mxu0 0
    %109 = vmatpush1.bf16.msra.mxu0 %v92
    %110 = vmatprep.subr.bf16.mxu0 0
    %111 = vmatpush1.bf16.msra.mxu0 %v93
    %112 = vmatprep.subr.bf16.mxu0 0
    %113 = vmatpush1.bf16.msra.mxu0 %v94
    %114 = vmatprep.subr.bf16.mxu0 0
    %115 = vmatpush1.bf16.msra.mxu0 %v95
    %116 = vmatprep.subr.bf16.mxu0 0
    %117 = vmatpush1.bf16.msra.mxu0 %v96
    %118 = vmatprep.subr.bf16.mxu0 0
    %119 = vmatpush1.bf16.msra.mxu0 %v97
    %120 = vmatprep.subr.bf16.mxu0 0
    %121 = vmatpush1.bf16.msra.mxu0 %v98
    %122 = vmatprep.subr.bf16.mxu0 0
    %123 = vmatpush1.bf16.msra.mxu0 %v99
    %124 = vmatprep.subr.bf16.mxu0 0
    %125 = vmatpush1.bf16.msra.mxu0 0
    %126 = vmatprep.subr.bf16.mxu0 0
    %127 = vmatpush1.bf16.msra.mxu0 0
    %128 = vmatprep.subr.bf16.mxu0 0
    %129 = vmatpush1.bf16.msra.mxu0 0
    %130 = vmatprep.subr.bf16.mxu0 0
    %131 = vmatpush1.bf16.msra.mxu0 0
    %132 = vmatprep.subr.bf16.mxu0 0
    %133 = vmatpush1.bf16.msra.mxu0 0
    %134 = vmatprep.subr.bf16.mxu0 0
    %135 = vmatpush1.bf16.msra.mxu0 0
    %136 = vmatprep.subr.bf16.mxu0 0
    %137 = vmatpush1.bf16.msra.mxu0 0
    %138 = vmatprep.subr.bf16.mxu0 0
    %139 = vmatpush1.bf16.msra.mxu0 0
    %140 = vmatprep.mubr.bf16.mxu0 0
    %141 = vmatmul.mubr.bf16.gmra.mrb[0].mxu0 %v59
    %v142 = vpop.f32.mrb[0].mxu0
    %v143 = vadd.f32 %v58, %v142
    %v144 = vpop.f32.mrb[0].mxu0
    %v145 = vpop.f32.mrb[0].mxu0
    %v146 = vpop.f32.mrb[0].mxu0
    %147 = vdwg.mxu0
    %v148 = vmax.f32 %v143, 0.0
    %v149 = vpack.c.bf16 %v148, %v148
    %v150 = vld [vmem:[#allocation2 + $0x80] sm:$0xf]
    %v151 = vld [vmem:[#allocation2 + $0x88] sm:$0xf]
    %v152 = vld [vmem:[#allocation2 + $0x90] sm:$0xf]
    %v153 = vld [vmem:[#allocation2 + $0x98] sm:$0xf]
    %v154 = vld [vmem:[#allocation2 + $0xa0] sm:$0xf]
    %v155 = vld [vmem:[#allocation2 + $0xa8] sm:$0xf]
    %v156 = vld [vmem:[#allocation2 + $0xb0] sm:$0xf]
    %v157 = vld [vmem:[#allocation2 + $0xb8] sm:$0xf]
    %v158 = vld [vmem:[#allocation2 + $0xc0] sm:$0xf]
    %v159 = vld [vmem:[#allocation2 + $0xc8] sm:$0xf]
    %v160 = vld [vmem:[#allocation2 + $0xd0] sm:$0xf]
    %v161 = vld [vmem:[#allocation2 + $0xd8] sm:$0xf]
    %v162 = vld [vmem:[#allocation2 + $0xe0] sm:$0xf]
    %v163 = vld [vmem:[#allocation2 + $0xe8] sm:$0xf]
    %v164 = vld [vmem:[#allocation2 + $0xf0] sm:$0xf]
    %v165 = vld [vmem:[#allocation2 + $0xf8] sm:$0xf]
    %v166 = vld [vmem:[%s2 + $0x1] ss:$0 sm:$0xff]
    %v183 = vunpack.c.l.b16 %v150
    %v184 = vunpack.c.l.b16 %v151
    %v185 = vunpack.c.l.b16 %v152
    %v186 = vunpack.c.l.b16 %v153
    %v187 = vunpack.c.l.b16 %v154
    %v188 = vunpack.c.l.b16 %v155
    %v189 = vunpack.c.l.b16 %v156
    %v190 = vunpack.c.l.b16 %v157
    %v191 = vunpack.c.l.b16 %v158
    %v192 = vunpack.c.l.b16 %v159
    %v193 = vunpack.c.l.b16 %v160
    %v194 = vunpack.c.l.b16 %v161
    %v195 = vunpack.c.l.b16 %v162
    %v196 = vunpack.c.l.b16 %v163
    %v197 = vunpack.c.l.b16 %v164
    %v198 = vunpack.c.l.b16 %v165
    %v199 = vpack.c.b16 %v184, %v183
    %v200 = vpack.c.b16 %v186, %v185
    %v201 = vpack.c.b16 %v188, %v187
    %v202 = vpack.c.b16 %v190, %v189
    %v203 = vpack.c.b16 %v192, %v191
    %v204 = vpack.c.b16 %v194, %v193
    %v205 = vpack.c.b16 %v196, %v195
    %v206 = vpack.c.b16 %v198, %v197
    %215 = vmatprep.subr.bf16.mxu0 0
    %216 = vmatpush1.bf16.msra.mxu0 %v199
    %217 = vmatprep.subr.bf16.mxu0 0
    %218 = vmatpush1.bf16.msra.mxu0 %v200
    %219 = vmatprep.subr.bf16.mxu0 0
    %220 = vmatpush1.bf16.msra.mxu0 %v201
    %221 = vmatprep.subr.bf16.mxu0 0
    %222 = vmatpush1.bf16.msra.mxu0 %v202
    %223 = vmatprep.subr.bf16.mxu0 0
    %224 = vmatpush1.bf16.msra.mxu0 %v203
    %225 = vmatprep.subr.bf16.mxu0 0
    %226 = vmatpush1.bf16.msra.mxu0 %v204
    %227 = vmatprep.subr.bf16.mxu0 0
    %228 = vmatpush1.bf16.msra.mxu0 %v205
    %229 = vmatprep.subr.bf16.mxu0 0
    %230 = vmatpush1.bf16.msra.mxu0 %v206
    %231 = vmatprep.subr.bf16.mxu0 0
    %232 = vmatpush1.bf16.msra.mxu0 0
    %233 = vmatprep.subr.bf16.mxu0 0
    %234 = vmatpush1.bf16.msra.mxu0 0
    %235 = vmatprep.subr.bf16.mxu0 0
    %236 = vmatpush1.bf16.msra.mxu0 0
    %237 = vmatprep.subr.bf16.mxu0 0
    %238 = vmatpush1.bf16.msra.mxu0 0
    %239 = vmatprep.subr.bf16.mxu0 0
    %240 = vmatpush1.bf16.msra.mxu0 0
    %241 = vmatprep.subr.bf16.mxu0 0
    %242 = vmatpush1.bf16.msra.mxu0 0
    %243 = vmatprep.subr.bf16.mxu0 0
    %244 = vmatpush1.bf16.msra.mxu0 0
    %245 = vmatprep.subr.bf16.mxu0 0
    %246 = vmatpush1.bf16.msra.mxu0 0
    %247 = vmatprep.mubr.bf16.mxu0 0
    %248 = vmatmul.mubr.bf16.gmra.mrb[0].mxu0 %v149
    %v249 = vpop.f32.mrb[0].mxu0
    %v250 = vadd.f32 %v166, %v249
    %v251 = vpop.f32.mrb[0].mxu0
    %v252 = vpop.f32.mrb[0].mxu0
    %v253 = vpop.f32.mrb[0].mxu0
    %254 = vdwg.mxu0
    %v255 = vmax.f32 %v250, 0.0
    %v256 = vpack.c.bf16 %v255, %v255
    %v257 = vld [vmem:[#allocation2 + $0x100] sm:$0xff]
    %v258 = vld [vmem:[#allocation2 + $0x108] sm:$0xff]
    %v259 = vld [vmem:[#allocation2 + $0x110] sm:$0xff]
    %v260 = vld [vmem:[#allocation2 + $0x118] sm:$0xff]
    %v261 = vld [vmem:[#allocation2 + $0x120] sm:$0xff]
    %v262 = vld [vmem:[#allocation2 + $0x128] sm:$0xff]
    %v263 = vld [vmem:[#allocation2 + $0x130] sm:$0xff]
    %v264 = vld [vmem:[#allocation2 + $0x138] sm:$0xff]
    %v265 = vld [vmem:[#allocation2 + $0x140] sm:$0xff]
    %v266 = vld [vmem:[#allocation2 + $0x148] sm:$0xff]
    %v267 = vld [vmem:[#allocation2 + $0x150] sm:$0xff]
    %v268 = vld [vmem:[#allocation2 + $0x158] sm:$0xff]
    %v269 = vld [vmem:[#allocation2 + $0x160] sm:$0xff]
    %v270 = vld [vmem:[#allocation2 + $0x168] sm:$0xff]
    %v271 = vld [vmem:[#allocation2 + $0x170] sm:$0xff]
    %v272 = vld [vmem:[#allocation2 + $0x178] sm:$0xff]
    %s273 = scalar_lea.vmem %s2, 2
    %v274 = vld [vmem:[%s273] ss:$8 sm:$0x3]
    %v276 = vlaneseq
    %v277 = vshrl.u32 %v276, 7
    %v278 = vsub.s32 0, %v277
    %v279 = vrot.slane %v274, %v278
    %v280 = vlaneseq
    %v281 = vshrl.u32 %v280, 7
    %v282 = vsub.s32 1, %v281
    %v283 = vrot.slane %v274, %v282
    %v302 = vunpack.c.l.b16 %v257
    %v303 = vunpack.c.h.b16 %v257
    %v304 = vunpack.c.l.b16 %v258
    %v305 = vunpack.c.h.b16 %v258
    %v306 = vunpack.c.l.b16 %v259
    %v307 = vunpack.c.h.b16 %v259
    %v308 = vunpack.c.l.b16 %v260
    %v309 = vunpack.c.h.b16 %v260
    %v310 = vunpack.c.l.b16 %v261
    %v311 = vunpack.c.h.b16 %v261
    %v312 = vunpack.c.l.b16 %v262
    %v313 = vunpack.c.h.b16 %v262
    %v314 = vunpack.c.l.b16 %v263
    %v315 = vunpack.c.h.b16 %v263
    %v316 = vunpack.c.l.b16 %v264
    %v317 = vunpack.c.h.b16 %v264
    %v318 = vunpack.c.l.b16 %v265
    %v319 = vunpack.c.h.b16 %v265
    %v320 = vunpack.c.l.b16 %v266
    %v321 = vunpack.c.h.b16 %v266
    %v322 = vunpack.c.l.b16 %v267
    %v323 = vunpack.c.h.b16 %v267
    %v324 = vunpack.c.l.b16 %v268
    %v325 = vunpack.c.h.b16 %v268
    %v326 = vunpack.c.l.b16 %v269
    %v327 = vunpack.c.h.b16 %v269
    %v328 = vunpack.c.l.b16 %v270
    %v329 = vunpack.c.h.b16 %v270
    %v330 = vunpack.c.l.b16 %v271
    %v331 = vunpack.c.h.b16 %v271
    %v332 = vunpack.c.l.b16 %v272
    %v333 = vunpack.c.h.b16 %v272
    %v334 = vpack.c.b16 %v304, %v302
    %v335 = vpack.c.b16 %v305, %v303
    %v336 = vpack.c.b16 %v308, %v306
    %v337 = vpack.c.b16 %v309, %v307
    %v338 = vpack.c.b16 %v312, %v310
    %v339 = vpack.c.b16 %v313, %v311
    %v340 = vpack.c.b16 %v316, %v314
    %v341 = vpack.c.b16 %v317, %v315
    %v342 = vpack.c.b16 %v320, %v318
    %v343 = vpack.c.b16 %v321, %v319
    %v344 = vpack.c.b16 %v324, %v322
    %v345 = vpack.c.b16 %v325, %v323
    %v346 = vpack.c.b16 %v328, %v326
    %v347 = vpack.c.b16 %v329, %v327
    %v348 = vpack.c.b16 %v332, %v330
    %v349 = vpack.c.b16 %v333, %v331
    %366 = vmatprep.subr.bf16.mxu0 %v335
    %367 = vmatpush1.bf16.msra.mxu0 %v334
    %368 = vmatprep.subr.bf16.mxu0 %v337
    %369 = vmatpush1.bf16.msra.mxu0 %v336
    %370 = vmatprep.subr.bf16.mxu0 %v339
    %371 = vmatpush1.bf16.msra.mxu0 %v338
    %372 = vmatprep.subr.bf16.mxu0 %v341
    %373 = vmatpush1.bf16.msra.mxu0 %v340
    %374 = vmatprep.subr.bf16.mxu0 %v343
    %375 = vmatpush1.bf16.msra.mxu0 %v342
    %376 = vmatprep.subr.bf16.mxu0 %v345
    %377 = vmatpush1.bf16.msra.mxu0 %v344
    %378 = vmatprep.subr.bf16.mxu0 %v347
    %379 = vmatpush1.bf16.msra.mxu0 %v346
    %380 = vmatprep.subr.bf16.mxu0 %v349
    %381 = vmatpush1.bf16.msra.mxu0 %v348
    %382 = vmatprep.subr.bf16.mxu0 0
    %383 = vmatpush1.bf16.msra.mxu0 0
    %384 = vmatprep.subr.bf16.mxu0 0
    %385 = vmatpush1.bf16.msra.mxu0 0
    %386 = vmatprep.subr.bf16.mxu0 0
    %387 = vmatpush1.bf16.msra.mxu0 0
    %388 = vmatprep.subr.bf16.mxu0 0
    %389 = vmatpush1.bf16.msra.mxu0 0
    %390 = vmatprep.subr.bf16.mxu0 0
    %391 = vmatpush1.bf16.msra.mxu0 0
    %392 = vmatprep.subr.bf16.mxu0 0
    %393 = vmatpush1.bf16.msra.mxu0 0
    %394 = vmatprep.subr.bf16.mxu0 0
    %395 = vmatpush1.bf16.msra.mxu0 0
    %396 = vmatprep.subr.bf16.mxu0 0
    %397 = vmatpush1.bf16.msra.mxu0 0
    %398 = vmatprep.mubr.bf16.mxu0 0
    %399 = vmatmul.mubr.bf16.gmra.mrb[0].mxu0 %v256
    %v400 = vpop.f32.mrb[0].mxu0
    %v401 = vadd.f32 %v279, %v400
    %v402 = vpop.f32.mrb[0].mxu0
    %v403 = vadd.f32 %v283, %v402
    %v404 = vpop.f32.mrb[0].mxu0
    %v405 = vpop.f32.mrb[0].mxu0
    %406 = vdwg.mxu0
    %407 = vst [vmem:[%s4] sm:$0xff] %v401
    %408 = vst [vmem:[%s4 + $0x8] sm:$0xff] %v403
    %v409 = vsub.f32 %v32, %v37
    %v410 = vmul.f32 %v409, %v38
    %v411 = vld [vmem:[#allocation2 + $0x180] sm:$0xf]
    %v412 = vld [vmem:[#allocation2 + $0x188] sm:$0xf]
    %v413 = vld [vmem:[#allocation2 + $0x190] sm:$0xf]
    %v414 = vld [vmem:[#allocation2 + $0x198] sm:$0xf]
    %v415 = vld [vmem:[#allocation2 + $0x1a0] sm:$0xf]
    %v416 = vld [vmem:[#allocation2 + $0x1a8] sm:$0xf]
    %v417 = vld [vmem:[#allocation2 + $0x1b0] sm:$0xf]
    %v418 = vld [vmem:[#allocation2 + $0x1b8] sm:$0xf]
    %v419 = vld [vmem:[#allocation2 + $0x1c0] sm:$0xf]
    %v420 = vld [vmem:[#allocation2 + $0x1c8] sm:$0xf]
    %v421 = vld [vmem:[#allocation2 + $0x1d0] sm:$0xf]
    %v422 = vld [vmem:[#allocation2 + $0x1d8] sm:$0xf]
    %v423 = vld [vmem:[#allocation2 + $0x1e0] sm:$0xf]
    %v424 = vld [vmem:[#allocation2 + $0x1e8] sm:$0xf]
    %v425 = vld [vmem:[#allocation2 + $0x1f0] sm:$0xf]
    %v426 = vld [vmem:[#allocation2 + $0x1f8] sm:$0xf]
    %v427 = vld [vmem:[%s2 + $0x3] ss:$0 sm:$0xff]
    %v428 = vpack.c.bf16 %v410, %v410
    %v445 = vunpack.c.l.b16 %v411
    %v446 = vunpack.c.l.b16 %v412
    %v447 = vunpack.c.l.b16 %v413
    %v448 = vunpack.c.l.b16 %v414
    %v449 = vunpack.c.l.b16 %v415
    %v450 = vunpack.c.l.b16 %v416
    %v451 = vunpack.c.l.b16 %v417
    %v452 = vunpack.c.l.b16 %v418
    %v453 = vunpack.c.l.b16 %v419
    %v454 = vunpack.c.l.b16 %v420
    %v455 = vunpack.c.l.b16 %v421
    %v456 = vunpack.c.l.b16 %v422
    %v457 = vunpack.c.l.b16 %v423
    %v458 = vunpack.c.l.b16 %v424
    %v459 = vunpack.c.l.b16 %v425
    %v460 = vunpack.c.l.b16 %v426
    %v461 = vpack.c.b16 %v446, %v445
    %v462 = vpack.c.b16 %v448, %v447
    %v463 = vpack.c.b16 %v450, %v449
    %v464 = vpack.c.b16 %v452, %v451
    %v465 = vpack.c.b16 %v454, %v453
    %v466 = vpack.c.b16 %v456, %v455
    %v467 = vpack.c.b16 %v458, %v457
    %v468 = vpack.c.b16 %v460, %v459
    %477 = vmatprep.subr.bf16.mxu0 0
    %478 = vmatpush1.bf16.msra.mxu0 %v461
    %479 = vmatprep.subr.bf16.mxu0 0
    %480 = vmatpush1.bf16.msra.mxu0 %v462
    %481 = vmatprep.subr.bf16.mxu0 0
    %482 = vmatpush1.bf16.msra.mxu0 %v463
    %483 = vmatprep.subr.bf16.mxu0 0
    %484 = vmatpush1.bf16.msra.mxu0 %v464
    %485 = vmatprep.subr.bf16.mxu0 0
    %486 = vmatpush1.bf16.msra.mxu0 %v465
    %487 = vmatprep.subr.bf16.mxu0 0
    %488 = vmatpush1.bf16.msra.mxu0 %v466
    %489 = vmatprep.subr.bf16.mxu0 0
    %490 = vmatpush1.bf16.msra.mxu0 %v467
    %491 = vmatprep.subr.bf16.mxu0 0
    %492 = vmatpush1.bf16.msra.mxu0 %v468
    %493 = vmatprep.subr.bf16.mxu0 0
    %494 = vmatpush1.bf16.msra.mxu0 0
    %495 = vmatprep.subr.bf16.mxu0 0
    %496 = vmatpush1.bf16.msra.mxu0 0
    %497 = vmatprep.subr.bf16.mxu0 0
    %498 = vmatpush1.bf16.msra.mxu0 0
    %499 = vmatprep.subr.bf16.mxu0 0
    %500 = vmatpush1.bf16.msra.mxu0 0
    %501 = vmatprep.subr.bf16.mxu0 0
    %502 = vmatpush1.bf16.msra.mxu0 0
    %503 = vmatprep.subr.bf16.mxu0 0
    %504 = vmatpush1.bf16.msra.mxu0 0
    %505 = vmatprep.subr.bf16.mxu0 0
    %506 = vmatpush1.bf16.msra.mxu0 0
    %507 = vmatprep.subr.bf16.mxu0 0
    %508 = vmatpush1.bf16.msra.mxu0 0
    %509 = vmatprep.mubr.bf16.mxu0 0
    %510 = vmatmul.mubr.bf16.gmra.mrb[0].mxu0 %v428
    %v511 = vpop.f32.mrb[0].mxu0
    %v512 = vadd.f32 %v427, %v511
    %v513 = vpop.f32.mrb[0].mxu0
    %v514 = vpop.f32.mrb[0].mxu0
    %v515 = vpop.f32.mrb[0].mxu0
    %516 = vdwg.mxu0
    %v517 = vmax.f32 %v512, 0.0
    %v518 = vpack.c.bf16 %v517, %v517
    %v519 = vld [vmem:[#allocation2 + $0x200] sm:$0xf]
    %v520 = vld [vmem:[#allocation2 + $0x208] sm:$0xf]
    %v521 = vld [vmem:[#allocation2 + $0x210] sm:$0xf]
    %v522 = vld [vmem:[#allocation2 + $0x218] sm:$0xf]
    %v523 = vld [vmem:[#allocation2 + $0x220] sm:$0xf]
    %v524 = vld [vmem:[#allocation2 + $0x228] sm:$0xf]
    %v525 = vld [vmem:[#allocation2 + $0x230] sm:$0xf]
    %v526 = vld [vmem:[#allocation2 + $0x238] sm:$0xf]
    %v527 = vld [vmem:[#allocation2 + $0x240] sm:$0xf]
    %v528 = vld [vmem:[#allocation2 + $0x248] sm:$0xf]
    %v529 = vld [vmem:[#allocation2 + $0x250] sm:$0xf]
    %v530 = vld [vmem:[#allocation2 + $0x258] sm:$0xf]
    %v531 = vld [vmem:[#allocation2 + $0x260] sm:$0xf]
    %v532 = vld [vmem:[#allocation2 + $0x268] sm:$0xf]
    %v533 = vld [vmem:[#allocation2 + $0x270] sm:$0xf]
    %v534 = vld [vmem:[#allocation2 + $0x278] sm:$0xf]
    %v535 = vld [vmem:[%s2 + $0x4] ss:$0 sm:$0xff]
    %v552 = vunpack.c.l.b16 %v519
    %v553 = vunpack.c.l.b16 %v520
    %v554 = vunpack.c.l.b16 %v521
    %v555 = vunpack.c.l.b16 %v522
    %v556 = vunpack.c.l.b16 %v523
    %v557 = vunpack.c.l.b16 %v524
    %v558 = vunpack.c.l.b16 %v525
    %v559 = vunpack.c.l.b16 %v526
    %v560 = vunpack.c.l.b16 %v527
    %v561 = vunpack.c.l.b16 %v528
    %v562 = vunpack.c.l.b16 %v529
    %v563 = vunpack.c.l.b16 %v530
    %v564 = vunpack.c.l.b16 %v531
    %v565 = vunpack.c.l.b16 %v532
    %v566 = vunpack.c.l.b16 %v533
    %v567 = vunpack.c.l.b16 %v534
    %v568 = vpack.c.b16 %v553, %v552
    %v569 = vpack.c.b16 %v555, %v554
    %v570 = vpack.c.b16 %v557, %v556
    %v571 = vpack.c.b16 %v559, %v558
    %v572 = vpack.c.b16 %v561, %v560
    %v573 = vpack.c.b16 %v563, %v562
    %v574 = vpack.c.b16 %v565, %v564
    %v575 = vpack.c.b16 %v567, %v566
    %584 = vmatprep.subr.bf16.mxu0 0
    %585 = vmatpush1.bf16.msra.mxu0 %v568
    %586 = vmatprep.subr.bf16.mxu0 0
    %587 = vmatpush1.bf16.msra.mxu0 %v569
    %588 = vmatprep.subr.bf16.mxu0 0
    %589 = vmatpush1.bf16.msra.mxu0 %v570
    %590 = vmatprep.subr.bf16.mxu0 0
    %591 = vmatpush1.bf16.msra.mxu0 %v571
    %592 = vmatprep.subr.bf16.mxu0 0
    %593 = vmatpush1.bf16.msra.mxu0 %v572
    %594 = vmatprep.subr.bf16.mxu0 0
    %595 = vmatpush1.bf16.msra.mxu0 %v573
    %596 = vmatprep.subr.bf16.mxu0 0
    %597 = vmatpush1.bf16.msra.mxu0 %v574
    %598 = vmatprep.subr.bf16.mxu0 0
    %599 = vmatpush1.bf16.msra.mxu0 %v575
    %600 = vmatprep.subr.bf16.mxu0 0
    %601 = vmatpush1.bf16.msra.mxu0 0
    %602 = vmatprep.subr.bf16.mxu0 0
    %603 = vmatpush1.bf16.msra.mxu0 0
    %604 = vmatprep.subr.bf16.mxu0 0
    %605 = vmatpush1.bf16.msra.mxu0 0
    %606 = vmatprep.subr.bf16.mxu0 0
    %607 = vmatpush1.bf16.msra.mxu0 0
    %608 = vmatprep.subr.bf16.mxu0 0
    %609 = vmatpush1.bf16.msra.mxu0 0
    %610 = vmatprep.subr.bf16.mxu0 0
    %611 = vmatpush1.bf16.msra.mxu0 0
    %612 = vmatprep.subr.bf16.mxu0 0
    %613 = vmatpush1.bf16.msra.mxu0 0
    %614 = vmatprep.subr.bf16.mxu0 0
    %615 = vmatpush1.bf16.msra.mxu0 0
    %616 = vmatprep.mubr.bf16.mxu0 0
    %617 = vmatmul.mubr.bf16.gmra.mrb[0].mxu0 %v518
    %v618 = vpop.f32.mrb[0].mxu0
    %v619 = vadd.f32 %v535, %v618
    %v620 = vpop.f32.mrb[0].mxu0
    %v621 = vpop.f32.mrb[0].mxu0
    %v622 = vpop.f32.mrb[0].mxu0
    %623 = vdwg.mxu0
    %v624 = vmax.f32 %v619, 0.0
    %v625 = vpack.c.bf16 %v624, %v624
    %v626 = vld [vmem:[#allocation2 + $0x280] sm:$0xff]
    %v627 = vld [vmem:[#allocation2 + $0x288] sm:$0xff]
    %v628 = vld [vmem:[#allocation2 + $0x290] sm:$0xff]
    %v629 = vld [vmem:[#allocation2 + $0x298] sm:$0xff]
    %v630 = vld [vmem:[#allocation2 + $0x2a0] sm:$0xff]
    %v631 = vld [vmem:[#allocation2 + $0x2a8] sm:$0xff]
    %v632 = vld [vmem:[#allocation2 + $0x2b0] sm:$0xff]
    %v633 = vld [vmem:[#allocation2 + $0x2b8] sm:$0xff]
    %v634 = vld [vmem:[#allocation2 + $0x2c0] sm:$0xff]
    %v635 = vld [vmem:[#allocation2 + $0x2c8] sm:$0xff]
    %v636 = vld [vmem:[#allocation2 + $0x2d0] sm:$0xff]
    %v637 = vld [vmem:[#allocation2 + $0x2d8] sm:$0xff]
    %v638 = vld [vmem:[#allocation2 + $0x2e0] sm:$0xff]
    %v639 = vld [vmem:[#allocation2 + $0x2e8] sm:$0xff]
    %v640 = vld [vmem:[#allocation2 + $0x2f0] sm:$0xff]
    %v641 = vld [vmem:[#allocation2 + $0x2f8] sm:$0xff]
    %s642 = scalar_lea.vmem %s2, 5
    %v643 = vld [vmem:[%s642] ss:$8 sm:$0x3]
    %v645 = vlaneseq
    %v646 = vshrl.u32 %v645, 7
    %v647 = vsub.s32 0, %v646
    %v648 = vrot.slane %v643, %v647
    %v649 = vlaneseq
    %v650 = vshrl.u32 %v649, 7
    %v651 = vsub.s32 1, %v650
    %v652 = vrot.slane %v643, %v651
    %v671 = vunpack.c.l.b16 %v626
    %v672 = vunpack.c.h.b16 %v626
    %v673 = vunpack.c.l.b16 %v627
    %v674 = vunpack.c.h.b16 %v627
    %v675 = vunpack.c.l.b16 %v628
    %v676 = vunpack.c.h.b16 %v628
    %v677 = vunpack.c.l.b16 %v629
    %v678 = vunpack.c.h.b16 %v629
    %v679 = vunpack.c.l.b16 %v630
    %v680 = vunpack.c.h.b16 %v630
    %v681 = vunpack.c.l.b16 %v631
    %v682 = vunpack.c.h.b16 %v631
    %v683 = vunpack.c.l.b16 %v632
    %v684 = vunpack.c.h.b16 %v632
    %v685 = vunpack.c.l.b16 %v633
    %v686 = vunpack.c.h.b16 %v633
    %v687 = vunpack.c.l.b16 %v634
    %v688 = vunpack.c.h.b16 %v634
    %v689 = vunpack.c.l.b16 %v635
    %v690 = vunpack.c.h.b16 %v635
    %v691 = vunpack.c.l.b16 %v636
    %v692 = vunpack.c.h.b16 %v636
    %v693 = vunpack.c.l.b16 %v637
    %v694 = vunpack.c.h.b16 %v637
    %v695 = vunpack.c.l.b16 %v638
    %v696 = vunpack.c.h.b16 %v638
    %v697 = vunpack.c.l.b16 %v639
    %v698 = vunpack.c.h.b16 %v639
    %v699 = vunpack.c.l.b16 %v640
    %v700 = vunpack.c.h.b16 %v640
    %v701 = vunpack.c.l.b16 %v641
    %v702 = vunpack.c.h.b16 %v641
    %v703 = vpack.c.b16 %v673, %v671
    %v704 = vpack.c.b16 %v674, %v672
    %v705 = vpack.c.b16 %v677, %v675
    %v706 = vpack.c.b16 %v678, %v676
    %v707 = vpack.c.b16 %v681, %v679
    %v708 = vpack.c.b16 %v682, %v680
    %v709 = vpack.c.b16 %v685, %v683
    %v710 = vpack.c.b16 %v686, %v684
    %v711 = vpack.c.b16 %v689, %v687
    %v712 = vpack.c.b16 %v690, %v688
    %v713 = vpack.c.b16 %v693, %v691
    %v714 = vpack.c.b16 %v694, %v692
    %v715 = vpack.c.b16 %v697, %v695
    %v716 = vpack.c.b16 %v698, %v696
    %v717 = vpack.c.b16 %v701, %v699
    %v718 = vpack.c.b16 %v702, %v700
    %735 = vmatprep.subr.bf16.mxu0 %v704
    %736 = vmatpush1.bf16.msra.mxu0 %v703
    %737 = vmatprep.subr.bf16.mxu0 %v706
    %738 = vmatpush1.bf16.msra.mxu0 %v705
    %739 = vmatprep.subr.bf16.mxu0 %v708
    %740 = vmatpush1.bf16.msra.mxu0 %v707
    %741 = vmatprep.subr.bf16.mxu0 %v710
    %742 = vmatpush1.bf16.msra.mxu0 %v709
    %743 = vmatprep.subr.bf16.mxu0 %v712
    %744 = vmatpush1.bf16.msra.mxu0 %v711
    %745 = vmatprep.subr.bf16.mxu0 %v714
    %746 = vmatpush1.bf16.msra.mxu0 %v713
    %747 = vmatprep.subr.bf16.mxu0 %v716
    %748 = vmatpush1.bf16.msra.mxu0 %v715
    %749 = vmatprep.subr.bf16.mxu0 %v718
    %750 = vmatpush1.bf16.msra.mxu0 %v717
    %751 = vmatprep.subr.bf16.mxu0 0
    %752 = vmatpush1.bf16.msra.mxu0 0
    %753 = vmatprep.subr.bf16.mxu0 0
    %754 = vmatpush1.bf16.msra.mxu0 0
    %755 = vmatprep.subr.bf16.mxu0 0
    %756 = vmatpush1.bf16.msra.mxu0 0
    %757 = vmatprep.subr.bf16.mxu0 0
    %758 = vmatpush1.bf16.msra.mxu0 0
    %759 = vmatprep.subr.bf16.mxu0 0
    %760 = vmatpush1.bf16.msra.mxu0 0
    %761 = vmatprep.subr.bf16.mxu0 0
    %762 = vmatpush1.bf16.msra.mxu0 0
    %763 = vmatprep.subr.bf16.mxu0 0
    %764 = vmatpush1.bf16.msra.mxu0 0
    %765 = vmatprep.subr.bf16.mxu0 0
    %766 = vmatpush1.bf16.msra.mxu0 0
    %767 = vmatprep.mubr.bf16.mxu0 0
    %768 = vmatmul.mubr.bf16.gmra.mrb[0].mxu0 %v625
    %v769 = vpop.f32.mrb[0].mxu0
    %v770 = vadd.f32 %v648, %v769
    %v771 = vpop.f32.mrb[0].mxu0
    %v772 = vadd.f32 %v652, %v771
    %v773 = vpop.f32.mrb[0].mxu0
    %v774 = vpop.f32.mrb[0].mxu0
    %775 = vdwg.mxu0
    %776 = vst [vmem:[%s4 + $0x10] sm:$0xff] %v770
    %777 = vst [vmem:[%s4 + $0x18] sm:$0xff] %v772
    %v778 = vmul.f32 %v403, 0.5
    %v779 = vmul.f32 %v778, 1.442695
    %v780 = vpow.pop %v779
    %v781 = vmul.f32 %v33, %v780
    %v782 = vadd.f32 %v781, %v401
    %v783 = vld [vmem:[#allocation2 + $0x300] sm:$0xf]
    %v784 = vld [vmem:[#allocation2 + $0x308] sm:$0xf]
    %v785 = vld [vmem:[#allocation2 + $0x310] sm:$0xf]
    %v786 = vld [vmem:[#allocation2 + $0x318] sm:$0xf]
    %v787 = vld [vmem:[#allocation2 + $0x320] sm:$0xf]
    %v788 = vld [vmem:[#allocation2 + $0x328] sm:$0xf]
    %v789 = vld [vmem:[#allocation2 + $0x330] sm:$0xf]
    %v790 = vld [vmem:[#allocation2 + $0x338] sm:$0xf]
    %v791 = vld [vmem:[#allocation2 + $0x340] sm:$0xf]
    %v792 = vld [vmem:[#allocation2 + $0x348] sm:$0xf]
    %v793 = vld [vmem:[#allocation2 + $0x350] sm:$0xf]
    %v794 = vld [vmem:[#allocation2 + $0x358] sm:$0xf]
    %v795 = vld [vmem:[#allocation2 + $0x360] sm:$0xf]
    %v796 = vld [vmem:[#allocation2 + $0x368] sm:$0xf]
    %v797 = vld [vmem:[#allocation2 + $0x370] sm:$0xf]
    %v798 = vld [vmem:[#allocation2 + $0x378] sm:$0xf]
    %v799 = vld [vmem:[%s2 + $0x6] ss:$0 sm:$0xff]
    %v800 = vpack.c.bf16 %v782, %v782
    %v817 = vunpack.c.l.b16 %v783
    %v818 = vunpack.c.l.b16 %v784
    %v819 = vunpack.c.l.b16 %v785
    %v820 = vunpack.c.l.b16 %v786
    %v821 = vunpack.c.l.b16 %v787
    %v822 = vunpack.c.l.b16 %v788
    %v823 = vunpack.c.l.b16 %v789
    %v824 = vunpack.c.l.b16 %v790
    %v825 = vunpack.c.l.b16 %v791
    %v826 = vunpack.c.l.b16 %v792
    %v827 = vunpack.c.l.b16 %v793
    %v828 = vunpack.c.l.b16 %v794
    %v829 = vunpack.c.l.b16 %v795
    %v830 = vunpack.c.l.b16 %v796
    %v831 = vunpack.c.l.b16 %v797
    %v832 = vunpack.c.l.b16 %v798
    %v833 = vpack.c.b16 %v818, %v817
    %v834 = vpack.c.b16 %v820, %v819
    %v835 = vpack.c.b16 %v822, %v821
    %v836 = vpack.c.b16 %v824, %v823
    %v837 = vpack.c.b16 %v826, %v825
    %v838 = vpack.c.b16 %v828, %v827
    %v839 = vpack.c.b16 %v830, %v829
    %v840 = vpack.c.b16 %v832, %v831
    %849 = vmatprep.subr.bf16.mxu0 0
    %850 = vmatpush1.bf16.msra.mxu0 %v833
    %851 = vmatprep.subr.bf16.mxu0 0
    %852 = vmatpush1.bf16.msra.mxu0 %v834
    %853 = vmatprep.subr.bf16.mxu0 0
    %854 = vmatpush1.bf16.msra.mxu0 %v835
    %855 = vmatprep.subr.bf16.mxu0 0
    %856 = vmatpush1.bf16.msra.mxu0 %v836
    %857 = vmatprep.subr.bf16.mxu0 0
    %858 = vmatpush1.bf16.msra.mxu0 %v837
    %859 = vmatprep.subr.bf16.mxu0 0
    %860 = vmatpush1.bf16.msra.mxu0 %v838
    %861 = vmatprep.subr.bf16.mxu0 0
    %862 = vmatpush1.bf16.msra.mxu0 %v839
    %863 = vmatprep.subr.bf16.mxu0 0
    %864 = vmatpush1.bf16.msra.mxu0 %v840
    %865 = vmatprep.subr.bf16.mxu0 0
    %866 = vmatpush1.bf16.msra.mxu0 0
    %867 = vmatprep.subr.bf16.mxu0 0
    %868 = vmatpush1.bf16.msra.mxu0 0
    %869 = vmatprep.subr.bf16.mxu0 0
    %870 = vmatpush1.bf16.msra.mxu0 0
    %871 = vmatprep.subr.bf16.mxu0 0
    %872 = vmatpush1.bf16.msra.mxu0 0
    %873 = vmatprep.subr.bf16.mxu0 0
    %874 = vmatpush1.bf16.msra.mxu0 0
    %875 = vmatprep.subr.bf16.mxu0 0
    %876 = vmatpush1.bf16.msra.mxu0 0
    %877 = vmatprep.subr.bf16.mxu0 0
    %878 = vmatpush1.bf16.msra.mxu0 0
    %879 = vmatprep.subr.bf16.mxu0 0
    %880 = vmatpush1.bf16.msra.mxu0 0
    %881 = vmatprep.mubr.bf16.mxu0 0
    %882 = vmatmul.mubr.bf16.gmra.mrb[0].mxu0 %v800
    %v883 = vpop.f32.mrb[0].mxu0
    %v884 = vadd.f32 %v799, %v883
    %v885 = vpop.f32.mrb[0].mxu0
    %v886 = vpop.f32.mrb[0].mxu0
    %v887 = vpop.f32.mrb[0].mxu0
    %888 = vdwg.mxu0
    %v889 = vmax.f32 %v884, 0.0
    %v890 = vpack.c.bf16 %v889, %v889
    %v891 = vld [vmem:[#allocation2 + $0x380] sm:$0xf]
    %v892 = vld [vmem:[#allocation2 + $0x388] sm:$0xf]
    %v893 = vld [vmem:[#allocation2 + $0x390] sm:$0xf]
    %v894 = vld [vmem:[#allocation2 + $0x398] sm:$0xf]
    %v895 = vld [vmem:[#allocation2 + $0x3a0] sm:$0xf]
    %v896 = vld [vmem:[#allocation2 + $0x3a8] sm:$0xf]
    %v897 = vld [vmem:[#allocation2 + $0x3b0] sm:$0xf]
    %v898 = vld [vmem:[#allocation2 + $0x3b8] sm:$0xf]
    %v899 = vld [vmem:[#allocation2 + $0x3c0] sm:$0xf]
    %v900 = vld [vmem:[#allocation2 + $0x3c8] sm:$0xf]
    %v901 = vld [vmem:[#allocation2 + $0x3d0] sm:$0xf]
    %v902 = vld [vmem:[#allocation2 + $0x3d8] sm:$0xf]
    %v903 = vld [vmem:[#allocation2 + $0x3e0] sm:$0xf]
    %v904 = vld [vmem:[#allocation2 + $0x3e8] sm:$0xf]
    %v905 = vld [vmem:[#allocation2 + $0x3f0] sm:$0xf]
    %v906 = vld [vmem:[#allocation2 + $0x3f8] sm:$0xf]
    %v907 = vld [vmem:[%s2 + $0x7] ss:$0 sm:$0xff]
    %v924 = vunpack.c.l.b16 %v891
    %v925 = vunpack.c.l.b16 %v892
    %v926 = vunpack.c.l.b16 %v893
    %v927 = vunpack.c.l.b16 %v894
    %v928 = vunpack.c.l.b16 %v895
    %v929 = vunpack.c.l.b16 %v896
    %v930 = vunpack.c.l.b16 %v897
    %v931 = vunpack.c.l.b16 %v898
    %v932 = vunpack.c.l.b16 %v899
    %v933 = vunpack.c.l.b16 %v900
    %v934 = vunpack.c.l.b16 %v901
    %v935 = vunpack.c.l.b16 %v902
    %v936 = vunpack.c.l.b16 %v903
    %v937 = vunpack.c.l.b16 %v904
    %v938 = vunpack.c.l.b16 %v905
    %v939 = vunpack.c.l.b16 %v906
    %v940 = vpack.c.b16 %v925, %v924
    %v941 = vpack.c.b16 %v927, %v926
    %v942 = vpack.c.b16 %v929, %v928
    %v943 = vpack.c.b16 %v931, %v930
    %v944 = vpack.c.b16 %v933, %v932
    %v945 = vpack.c.b16 %v935, %v934
    %v946 = vpack.c.b16 %v937, %v936
    %v947 = vpack.c.b16 %v939, %v938
    %956 = vmatprep.subr.bf16.mxu0 0
    %957 = vmatpush1.bf16.msra.mxu0 %v940
    %958 = vmatprep.subr.bf16.mxu0 0
    %959 = vmatpush1.bf16.msra.mxu0 %v941
    %960 = vmatprep.subr.bf16.mxu0 0
    %961 = vmatpush1.bf16.msra.mxu0 %v942
    %962 = vmatprep.subr.bf16.mxu0 0
    %963 = vmatpush1.bf16.msra.mxu0 %v943
    %964 = vmatprep.subr.bf16.mxu0 0
    %965 = vmatpush1.bf16.msra.mxu0 %v944
    %966 = vmatprep.subr.bf16.mxu0 0
    %967 = vmatpush1.bf16.msra.mxu0 %v945
    %968 = vmatprep.subr.bf16.mxu0 0
    %969 = vmatpush1.bf16.msra.mxu0 %v946
    %970 = vmatprep.subr.bf16.mxu0 0
    %971 = vmatpush1.bf16.msra.mxu0 %v947
    %972 = vmatprep.subr.bf16.mxu0 0
    %973 = vmatpush1.bf16.msra.mxu0 0
    %974 = vmatprep.subr.bf16.mxu0 0
    %975 = vmatpush1.bf16.msra.mxu0 0
    %976 = vmatprep.subr.bf16.mxu0 0
    %977 = vmatpush1.bf16.msra.mxu0 0
    %978 = vmatprep.subr.bf16.mxu0 0
    %979 = vmatpush1.bf16.msra.mxu0 0
    %980 = vmatprep.subr.bf16.mxu0 0
    %981 = vmatpush1.bf16.msra.mxu0 0
    %982 = vmatprep.subr.bf16.mxu0 0
    %983 = vmatpush1.bf16.msra.mxu0 0
    %984 = vmatprep.subr.bf16.mxu0 0
    %985 = vmatpush1.bf16.msra.mxu0 0
    %986 = vmatprep.subr.bf16.mxu0 0
    %987 = vmatpush1.bf16.msra.mxu0 0
    %988 = vmatprep.mubr.bf16.mxu0 0
    %989 = vmatmul.mubr.bf16.gmra.mrb[0].mxu0 %v890
    %v990 = vpop.f32.mrb[0].mxu0
    %v991 = vadd.f32 %v907, %v990
    %v992 = vpop.f32.mrb[0].mxu0
    %v993 = vpop.f32.mrb[0].mxu0
    %v994 = vpop.f32.mrb[0].mxu0
    %995 = vdwg.mxu0
    %v996 = vmax.f32 %v991, 0.0
    %v997 = vpack.c.bf16 %v996, %v996
    %v998 = vld [vmem:[#allocation2 + $0x400] sm:$0xf]
    %v999 = vld [vmem:[#allocation2 + $0x408] sm:$0xf]
    %v1000 = vld [vmem:[#allocation2 + $0x410] sm:$0xf]
    %v1001 = vld [vmem:[#allocation2 + $0x418] sm:$0xf]
    %v1002 = vld [vmem:[#allocation2 + $0x420] sm:$0xf]
    %v1003 = vld [vmem:[#allocation2 + $0x428] sm:$0xf]
    %v1004 = vld [vmem:[#allocation2 + $0x430] sm:$0xf]
    %v1005 = vld [vmem:[#allocation2 + $0x438] sm:$0xf]
    %v1006 = vld [vmem:[#allocation2 + $0x440] sm:$0xf]
    %v1007 = vld [vmem:[#allocation2 + $0x448] sm:$0xf]
    %v1008 = vld [vmem:[#allocation2 + $0x450] sm:$0xf]
    %v1009 = vld [vmem:[#allocation2 + $0x458] sm:$0xf]
    %v1010 = vld [vmem:[#allocation2 + $0x460] sm:$0xf]
    %v1011 = vld [vmem:[#allocation2 + $0x468] sm:$0xf]
    %v1012 = vld [vmem:[#allocation2 + $0x470] sm:$0xf]
    %v1013 = vld [vmem:[#allocation2 + $0x478] sm:$0xf]
    %v1014 = vld [vmem:[%s2 + $0x10] ss:$0 sm:$0xff]
    %v1031 = vunpack.c.l.b16 %v998
    %v1032 = vunpack.c.l.b16 %v999
    %v1033 = vunpack.c.l.b16 %v1000
    %v1034 = vunpack.c.l.b16 %v1001
    %v1035 = vunpack.c.l.b16 %v1002
    %v1036 = vunpack.c.l.b16 %v1003
    %v1037 = vunpack.c.l.b16 %v1004
    %v1038 = vunpack.c.l.b16 %v1005
    %v1039 = vunpack.c.l.b16 %v1006
    %v1040 = vunpack.c.l.b16 %v1007
    %v1041 = vunpack.c.l.b16 %v1008
    %v1042 = vunpack.c.l.b16 %v1009
    %v1043 = vunpack.c.l.b16 %v1010
    %v1044 = vunpack.c.l.b16 %v1011
    %v1045 = vunpack.c.l.b16 %v1012
    %v1046 = vunpack.c.l.b16 %v1013
    %v1047 = vpack.c.b16 %v1032, %v1031
    %v1048 = vpack.c.b16 %v1034, %v1033
    %v1049 = vpack.c.b16 %v1036, %v1035
    %v1050 = vpack.c.b16 %v1038, %v1037
    %v1051 = vpack.c.b16 %v1040, %v1039
    %v1052 = vpack.c.b16 %v1042, %v1041
    %v1053 = vpack.c.b16 %v1044, %v1043
    %v1054 = vpack.c.b16 %v1046, %v1045
    %1063 = vmatprep.subr.bf16.mxu0 0
    %1064 = vmatpush1.bf16.msra.mxu0 %v1047
    %1065 = vmatprep.subr.bf16.mxu0 0
    %1066 = vmatpush1.bf16.msra.mxu0 %v1048
    %1067 = vmatprep.subr.bf16.mxu0 0
    %1068 = vmatpush1.bf16.msra.mxu0 %v1049
    %1069 = vmatprep.subr.bf16.mxu0 0
    %1070 = vmatpush1.bf16.msra.mxu0 %v1050
    %1071 = vmatprep.subr.bf16.mxu0 0
    %1072 = vmatpush1.bf16.msra.mxu0 %v1051
    %1073 = vmatprep.subr.bf16.mxu0 0
    %1074 = vmatpush1.bf16.msra.mxu0 %v1052
    %1075 = vmatprep.subr.bf16.mxu0 0
    %1076 = vmatpush1.bf16.msra.mxu0 %v1053
    %1077 = vmatprep.subr.bf16.mxu0 0
    %1078 = vmatpush1.bf16.msra.mxu0 %v1054
    %1079 = vmatprep.subr.bf16.mxu0 0
    %1080 = vmatpush1.bf16.msra.mxu0 0
    %1081 = vmatprep.subr.bf16.mxu0 0
    %1082 = vmatpush1.bf16.msra.mxu0 0
    %1083 = vmatprep.subr.bf16.mxu0 0
    %1084 = vmatpush1.bf16.msra.mxu0 0
    %1085 = vmatprep.subr.bf16.mxu0 0
    %1086 = vmatpush1.bf16.msra.mxu0 0
    %1087 = vmatprep.subr.bf16.mxu0 0
    %1088 = vmatpush1.bf16.msra.mxu0 0
    %1089 = vmatprep.subr.bf16.mxu0 0
    %1090 = vmatpush1.bf16.msra.mxu0 0
    %1091 = vmatprep.subr.bf16.mxu0 0
    %1092 = vmatpush1.bf16.msra.mxu0 0
    %1093 = vmatprep.subr.bf16.mxu0 0
    %1094 = vmatpush1.bf16.msra.mxu0 0
    %1095 = vmatprep.mubr.bf16.mxu0 0
    %1096 = vmatmul.mubr.bf16.gmra.mrb[0].mxu0 %v997
    %v1097 = vpop.f32.mrb[0].mxu0
    %v1098 = vadd.f32 %v1014, %v1097
    %v1099 = vpop.f32.mrb[0].mxu0
    %v1100 = vpop.f32.mrb[0].mxu0
    %v1101 = vpop.f32.mrb[0].mxu0
    %1102 = vdwg.mxu0
    %1103 = vst [vmem:[%s3 + $0x8] sm:$0xff] %v1098
    %v1104 = vmul.f32 %v1098, %v36
    %v1105 = vadd.f32 %v1104, %v34
    %1106 = vst [vmem:[%s3 + $0x10] sm:$0xff] %v1105
    // Predicated region
    $region18: #{vae_forward.1} parent=1 // pred_check
      _
    $region19: #{vae_forward.1} parent=1 // pred_check_branch
      %1108 = sbr.rel (0) target = $region21
    $region20: #{vae_forward.1} parent=1 // pred_region
      _
    $region21: #{vae_forward.1} parent=1 // pred_fallthru
      _
    // Predicated region
    $region22: #{vae_forward.1} parent=1 // pred_check
      _
    $region23: #{vae_forward.1} parent=1 // pred_check_branch
      %1110 = sbr.rel (0) target = $region25
    $region24: #{vae_forward.1} parent=1 // pred_region
      _
    $region25: #{vae_forward.1} parent=1 // pred_fallthru
      _
    // Predicated region
    $region26: #{vae_forward.1} parent=1 // pred_check
      _
    $region27: #{vae_forward.1} parent=1 // pred_check_branch
      %1112 = sbr.rel (0) target = $region29
    $region28: #{vae_forward.1} parent=1 // pred_region
      _
    $region29: #{vae_forward.1} parent=1 // pred_fallthru
      _
    // Predicated region
    $region30: #{vae_forward.1} parent=1 // pred_check
      _
    $region31: #{vae_forward.1} parent=1 // pred_check_branch
      %1114 = sbr.rel (0) target = $region33
    $region32: #{vae_forward.1} parent=1 // pred_region
      _
    $region33: #{vae_forward.1} parent=1 // pred_fallthru
      _
    %1115 = vsyncpa [#allocation3], 1

</llo_original>
